<compile_context>
chip_gen: v6e
topology: v6e:2x2x1
jax: 0.10.0
libtpu: 0.0.40
codegen_flags: <defaults>
</compile_context>

<pallas_src>
import functools
import math

import jax
import jax.numpy as jnp
from jax.experimental import pallas as pl
from jax.experimental.pallas import tpu as pltpu


def _round_up(x, m):
    return (x + m - 1) // m * m


def _arc_margin_kernel(x_ref, w_ref, label_ref, col_ref, out_ref, *,
                       sub, s, cos_m, sin_m, th, mm, easy_margin):
    """One (class-tile, batch-tile) grid step.

    x_ref:     (TB, D)       L2-normalized rows, compute dtype (bf16).
    w_ref:     (sub, D, TC)  L2-normalized class vectors, compute dtype.
    label_ref: (TB, 1)       int32 (-1 for padded batch rows).
    col_ref:   (1, TC)       int32 global class index of each output column.
    out_ref:   (TB, TC)      f32.
    """
    x = x_ref[...]                                     # (TB, D)

    # cosine = max over the `sub` copies of <x_n, w_n>.  `sub` is a small
    # static constant, so this unrolls into `sub` MXU matmuls + elementwise max.
    cos = jnp.dot(x, w_ref[0], preferred_element_type=jnp.float32)
    for k in range(1, sub):
        cos = jnp.maximum(
            cos, jnp.dot(x, w_ref[k], preferred_element_type=jnp.float32))

    # ArcFace margin, all in f32.  Clamp 1 - cos^2 at 0: bf16 rounding can push
    # |cos| marginally above 1 and the sqrt would NaN otherwise.
    sine = jnp.sqrt(jnp.maximum(1.0 - cos * cos, 0.0))
    phi = cos * cos_m - sine * sin_m
    if easy_margin:
        phi = jnp.where(cos > 0.0, phi, cos)
    else:
        phi = jnp.where(cos - th > 0.0, phi, cos - mm)

    # One-hot blend using streamed global column ids (no program_id needed),
    # then the final scale.
    out_ref[...] = jnp.where(col_ref[...] == label_ref[...], phi, cos) * s


def arc_margin_product(x, label, weight, *, out_features, s=32.0, m=0.5,
                       sub=1, easy_margin=False,
                       compute_dtype=jnp.bfloat16,
                       block_classes=1024, block_batch=256):
    """ArcMarginProduct.forward.

    x:      (B, in_features) f32
    label:  (B,) int
    weight: (out_features * sub, in_features) f32
    Returns (B, out_features) f32.

    block_classes / block_batch: VMEM tile sizes (multiples of 128 / 8).
    block_batch=256 suits the 256-wide MXU on v6e/v7x; 128 is enough on v5e.
    """
    B, D = x.shape
    CS, D2 = weight.shape
    assert D == D2 and CS == out_features * sub
    assert block_classes % 128 == 0 and block_batch % 8 == 0

    cos_m = math.cos(m)
    sin_m = math.sin(m)
    th = math.cos(math.pi - m)
    mm = math.sin(math.pi - m) * m

    # --- class tiling: largest multiple of 128 dividing round_up(C, 128) that
    # fits block_classes -> lane-dense output tiles, minimal class padding.
    c128 = _round_up(out_features, 128)
    tc = min(block_classes, c128)
    for cand in range(min(block_classes, c128), 127, -128):
        if c128 % cand == 0:
            tc = cand
            break
    c_pad = _round_up(c128, tc)                 # == c128 since tc | c128

    tb = min(block_batch, _round_up(B, 8))
    b_pad = _round_up(B, tb)

    # --- host-side prep (hoisted out of the kernel): L2-normalize in f32,
    # then cast to the streaming dtype.  Padded rows/columns are zero, so
    # their cosines are exactly 0 (no divisions happen in the kernel).
    # TODO(synk): cache the normalized/transposed/padded weight (and col_ids)
    # across calls — for real ArcFace heads this prep is a full HBM pass.
    xn = x / jnp.maximum(jnp.linalg.norm(x, axis=1, keepdims=True), 1e-12)
    x_p = jnp.pad(xn, ((0, b_pad - B), (0, 0))).astype(compute_dtype)

    wn = weight / jnp.maximum(
        jnp.linalg.norm(weight, axis=1, keepdims=True), 1e-12)
    # weight row (c*sub + k) -> w3[k, :, c]  (class axis last = lane-dense,
    # plain (TB,D) x (D,TC) dot in the kernel, no in-kernel transpose).
    w3 = wn.reshape(out_features, sub, D).transpose(1, 2, 0)
    w3 = jnp.pad(w3, ((0, 0), (0, 0), (0, c_pad - out_features)))
    w3 = w3.astype(compute_dtype)

    lbl = jnp.pad(label.astype(jnp.int32).reshape(B, 1),
                  ((0, b_pad - B), (0, 0)), constant_values=-1)
    col_ids = jnp.arange(c_pad, dtype=jnp.int32).reshape(1, c_pad)

    # class outer, batch inner: the weight block index depends only on the
    # outer axis, so each weight tile is fetched once and reused across all
    # batch tiles; the small x/label/out blocks are the ones re-streamed.
    grid = (c_pad // tc, b_pad // tb)

    kernel = functools.partial(
        _arc_margin_kernel, sub=sub, s=float(s), cos_m=cos_m, sin_m=sin_m,
        th=th, mm=mm, easy_margin=bool(easy_margin))

    wd = jnp.dtype(compute_dtype).itemsize
    est = (2 * sub * tc * D * wd          # weight blocks (double-buffered)
           + 2 * tb * D * wd              # x blocks
           + 2 * tb * tc * 4              # output blocks
           + 2 * tb * 4 + 2 * tc * 4)     # label + column ids
    vmem_limit = int(min(max(est + (8 << 20), 24 << 20), 48 << 20))

    out = pl.pallas_call(
        kernel,
        out_shape=jax.ShapeDtypeStruct((b_pad, c_pad), jnp.float32),
        grid=grid,
        in_specs=[
            pl.BlockSpec((tb, D), lambda j, b: (b, 0)),
            pl.BlockSpec((sub, D, tc), lambda j, b: (0, 0, j)),
            pl.BlockSpec((tb, 1), lambda j, b: (b, 0)),
            pl.BlockSpec((1, tc), lambda j, b: (0, j)),
        ],
        out_specs=pl.BlockSpec((tb, tc), lambda j, b: (b, j)),
        compiler_params=pltpu.CompilerParams(
            dimension_semantics=("parallel", "parallel"),
            vmem_limit_bytes=vmem_limit),
    )(x_p, w3, lbl, col_ids)

    return out[:B, :out_features]


def _reference(x, label, weight, *, out_features, s, m, sub, easy_margin,
               compute_dtype):
    """Pure-JAX reference matching the kernel's numerics: L2-normalize in f32,
    quantize to compute_dtype, matmul with f32 accumulation."""
    cos_m, sin_m = math.cos(m), math.sin(m)
    th, mm = math.cos(math.pi - m), math.sin(math.pi - m) * m
    xn = x / jnp.maximum(jnp.linalg.norm(x, axis=1, keepdims=True), 1e-12)
    wn = weight / jnp.maximum(
        jnp.linalg.norm(weight, axis=1, keepdims=True), 1e-12)
    xq = xn.astype(compute_dtype).astype(jnp.float32)
    wq = wn.astype(compute_dtype).astype(jnp.float32)
    cosine = jnp.matmul(xq, wq.T, precision=jax.lax.Precision.HIGHEST)
    if sub > 1:
        cosine = jnp.max(cosine.reshape(-1, out_features, sub), axis=2)
    sine = jnp.sqrt(jnp.maximum(1.0 - cosine ** 2, 0.0))
    phi = cosine * cos_m - sine * sin_m
    if easy_margin:
        phi = jnp.where(cosine > 0, phi, cosine)
    else:
        phi = jnp.where(cosine - th > 0, phi, cosine - mm)
    one_hot = jax.nn.one_hot(label, out_features, dtype=jnp.float32)
    return (one_hot * phi + (1.0 - one_hot) * cosine) * s


if __name__ == "__main__":
    def run_case(key, B, in_features, out_features, sub, easy_margin):
        kx, kw, kl = jax.random.split(key, 3)
        x = jax.random.normal(kx, (B, in_features), dtype=jnp.float32)
        # nn.init.xavier_uniform_: U(-a, a), a = sqrt(6 / (fan_in + fan_out))
        bound = math.sqrt(6.0 / (in_features + out_features * sub))
        weight = jax.random.uniform(kw, (out_features * sub, in_features),
                                    minval=-bound, maxval=bound,
                                    dtype=jnp.float32)
        label = jax.random.randint(kl, (B,), 0, out_features, dtype=jnp.int32)

        out = arc_margin_product(x, label, weight, out_features=out_features,
                                 s=32.0, m=0.5, sub=sub,
                                 easy_margin=easy_margin)
        out = jax.block_until_ready(out)

        ref = _reference(x, label, weight, out_features=out_features, s=32.0,
                         m=0.5, sub=sub, easy_margin=easy_margin,
                         compute_dtype=jnp.bfloat16)
        assert out.shape == (B, out_features)
        err = float(jnp.max(jnp.abs(out - ref)))
        assert jnp.allclose(out, ref, atol=5e-3, rtol=5e-3), err

    key = jax.random.PRNGKey(0)
    k1, k2 = jax.random.split(key)
    run_case(k1, B=8, in_features=128, out_features=200, sub=1,
             easy_margin=False)
    run_case(k2, B=8, in_features=128, out_features=200, sub=2,
             easy_margin=False)

    print("KERNEL_OK")
</pallas_src>

<mosaic_0001>
module attributes {stable_mosaic.version = 11 : i64} {
  func.func @_arc_margin_kernel(%arg0: i32, %arg1: i32, %arg2: memref<8x128xbf16, #tpu.memory_space<vmem>>, %arg3: memref<1x128x256xbf16, #tpu.memory_space<vmem>>, %arg4: memref<8x1xi32, #tpu.memory_space<vmem>>, %arg5: memref<1x256xi32, #tpu.memory_space<vmem>>, %arg6: memref<8x256xf32, #tpu.memory_space<vmem>>) attributes {dimension_semantics = [#tpu.dimension_semantics<parallel>, #tpu.dimension_semantics<parallel>], iteration_bounds = array<i64: 1, 1>, scalar_prefetch = 0 : i64, scratch_operands = 0 : i64, tpu.core_type = #tpu.core_type<tc>, window_params = [{transform_indices = @transform_0, window_bounds = array<i64: 8, 128>}, {transform_indices = @transform_1, window_bounds = array<i64: 1, 128, 256>}, {transform_indices = @transform_2, window_bounds = array<i64: 8, 1>}, {transform_indices = @transform_3, window_bounds = array<i64: 1, 256>}, {transform_indices = @transform_4, window_bounds = array<i64: 8, 256>}]} {
    %c0 = arith.constant 0 : index
    %c0_0 = arith.constant 0 : index
    %0 = vector.load %arg2[%c0, %c0_0] : memref<8x128xbf16, #tpu.memory_space<vmem>>, vector<8x128xbf16>
    %c0_1 = arith.constant 0 : index
    %c0_2 = arith.constant 0 : index
    %c0_3 = arith.constant 0 : index
    %1 = vector.load %arg3[%c0_1, %c0_2, %c0_3] : memref<1x128x256xbf16, #tpu.memory_space<vmem>>, vector<1x128x256xbf16>
    %2 = vector.shape_cast %1 : vector<1x128x256xbf16> to vector<128x256xbf16>
    %cst = arith.constant dense<0.000000e+00> : vector<8x256xf32>
    %3 = tpu.matmul %0, %2, %cst {dimension_numbers = #tpu.dot_dimension_numbers<[1], [0], [0], [1], [0, 0, 1, 1], [], []>} : vector<8x128xbf16>, vector<128x256xbf16>, vector<8x256xf32> -> vector<8x256xf32>
    %4 = arith.mulf %3, %3 : vector<8x256xf32>
    %cst_4 = arith.constant 1.000000e+00 : f32
    %5 = vector.broadcast %cst_4 : f32 to vector<8x256xf32>
    %6 = arith.subf %5, %4 : vector<8x256xf32>
    %cst_5 = arith.constant 0.000000e+00 : f32
    %7 = vector.broadcast %cst_5 : f32 to vector<8x256xf32>
    %8 = arith.maximumf %6, %7 : vector<8x256xf32>
    %9 = math.sqrt %8 : vector<8x256xf32>
    %cst_6 = arith.constant 0.87758255 : f32
    %10 = vector.broadcast %cst_6 : f32 to vector<8x256xf32>
    %11 = arith.mulf %3, %10 : vector<8x256xf32>
    %cst_7 = arith.constant 0.47942555 : f32
    %12 = vector.broadcast %cst_7 : f32 to vector<8x256xf32>
    %13 = arith.mulf %9, %12 : vector<8x256xf32>
    %14 = arith.subf %11, %13 : vector<8x256xf32>
    %cst_8 = arith.constant -0.87758255 : f32
    %15 = vector.broadcast %cst_8 : f32 to vector<8x256xf32>
    %16 = arith.subf %3, %15 : vector<8x256xf32>
    %cst_9 = arith.constant 0.000000e+00 : f32
    %17 = vector.broadcast %cst_9 : f32 to vector<8x256xf32>
    %18 = arith.cmpf ogt, %16, %17 : vector<8x256xf32>
    %cst_10 = arith.constant 0.239712775 : f32
    %19 = vector.broadcast %cst_10 : f32 to vector<8x256xf32>
    %20 = arith.subf %3, %19 : vector<8x256xf32>
    %21 = arith.select %18, %14, %20 : vector<8x256xi1>, vector<8x256xf32>
    %c0_11 = arith.constant 0 : index
    %c0_12 = arith.constant 0 : index
    %22 = vector.load %arg5[%c0_11, %c0_12] : memref<1x256xi32, #tpu.memory_space<vmem>>, vector<1x256xi32>
    %c0_13 = arith.constant 0 : index
    %c0_14 = arith.constant 0 : index
    %23 = vector.load %arg4[%c0_13, %c0_14] : memref<8x1xi32, #tpu.memory_space<vmem>>, vector<8x1xi32>
    %24 = vector.broadcast %22 : vector<1x256xi32> to vector<8x256xi32>
    %25 = vector.broadcast %23 : vector<8x1xi32> to vector<8x256xi32>
    %26 = arith.cmpi eq, %24, %25 : vector<8x256xi32>
    %27 = arith.select %26, %21, %3 : vector<8x256xi1>, vector<8x256xf32>
    %cst_15 = arith.constant 3.200000e+01 : f32
    %28 = vector.broadcast %cst_15 : f32 to vector<8x256xf32>
    %29 = arith.mulf %27, %28 : vector<8x256xf32>
    %c0_16 = arith.constant 0 : index
    %c0_17 = arith.constant 0 : index
    %30 = vector.load %arg6[%c0_16, %c0_17] : memref<8x256xf32, #tpu.memory_space<vmem>>, vector<8x256xf32>
    tpu.vector_store %arg6[%c0_16, %c0_17], %29 {strides = array<i32>} : memref<8x256xf32, #tpu.memory_space<vmem>>, vector<8x256xf32>,
    return
  }
  func.func @transform_0(%arg0: i32, %arg1: i32) -> (i32, i32) {
    %c0_i32 = arith.constant 0 : i32
    %c0_i32_0 = arith.constant 0 : i32
    return %arg1, %c0_i32 : i32, i32
  }
  func.func @transform_1(%arg0: i32, %arg1: i32) -> (i32, i32, i32) {
    %c0_i32 = arith.constant 0 : i32
    %c0_i32_0 = arith.constant 0 : i32
    %c0_i32_1 = arith.constant 0 : i32
    return %c0_i32, %c0_i32_0, %arg0 : i32, i32, i32
  }
  func.func @transform_2(%arg0: i32, %arg1: i32) -> (i32, i32) {
    %c0_i32 = arith.constant 0 : i32
    %c0_i32_0 = arith.constant 0 : i32
    return %arg1, %c0_i32 : i32, i32
  }
  func.func @transform_3(%arg0: i32, %arg1: i32) -> (i32, i32) {
    %c0_i32 = arith.constant 0 : i32
    %c0_i32_0 = arith.constant 0 : i32
    return %c0_i32, %arg0 : i32, i32
  }
  func.func @transform_4(%arg0: i32, %arg1: i32) -> (i32, i32) {
    %c0_i32 = arith.constant 0 : i32
    return %arg1, %arg0 : i32, i32
  }
}

</mosaic_0001>

<llo_original>
// kernel: tpu_custom_call.1
$region0: #{tpu_custom_call.1}
  #allocation0 [shape = 'u32[]', space=smem, size = 0x4, offset = 0x4, fixed_abs, tag = 'smem constant byte address 0x4 - core index']
  #allocation1 [shape = 'u32[144,128]{1,0:T(1,128)}', space=vmem, size = 0x12000, scoped, tag = 'internal scratch']
  %s0 = inlined_call_operand.vmem [shape: bf16[8,128], index: 0, kind: input, shape index: {}]
  %s1 = inlined_call_operand.hbm [shape: bf16[1,128,256], index: 1, kind: input, shape index: {}]
  %s2 = inlined_call_operand.vmem [shape: s32[8,1], index: 2, kind: input, shape index: {}]
  %s3 = inlined_call_operand.vmem [shape: s32[1,256], index: 3, kind: input, shape index: {}]
  %s4 = inlined_call_operand.hbm [shape: f32[8,256], index: 4, kind: output, shape index: {}]
  %s5 = sld [smem:[#allocation0]]
  $region30: #{tpu_custom_call.1} parent=0
    _
  %s7 = ssub.s32 1, %s5
  %s8 = scalar_select 0, %s7, %s5
  $region1: #{tpu_custom_call.1} parent=0
    #allocation2 [shape = 'u8[65536]{0}', space=vmem, size = 0x10000, scoped, tag = 'input window, operand 1, single buffered']
    #allocation3 [shape = 's32[1]{0}', space=sflag, size = 0x4, scoped, tag = 'scoped memory for tpu_custom_call.1']
    #allocation4 [shape = 's32[1]{0}', space=sflag, size = 0x4, scoped, tag = 'scoped memory for tpu_custom_call.1']
    #allocation5 [shape = 'u8[8192]{0}', space=vmem, size = 0x2000, scoped, tag = 'output window, operand 0, single buffered']
    %9 = vsyncpa [#allocation3], 0
    %10 = vsyncpa [#allocation4], 0
    // Predicated region
    $region2: #{tpu_custom_call.1} parent=1 // pred_check
      _
    $region3: #{tpu_custom_call.1} parent=1 // pred_check_branch
      %12 = sbr.rel (0) target = $region5
    $region4: #{tpu_custom_call.1} parent=1 // pred_region
      _
    $region5: #{tpu_custom_call.1} parent=1 // pred_fallthru
      _
    // Predicated region
    $region6: #{tpu_custom_call.1} parent=1 // pred_check
      _
    $region7: #{tpu_custom_call.1} parent=1 // pred_check_branch
      %14 = sbr.rel (0) target = $region9
    $region8: #{tpu_custom_call.1} parent=1 // pred_region
      %s16 = ssub.s32 2048, 2048
      %17 = vsyncadd [#allocation3], %s16
      %s18 = sshll.u32 [#allocation2], 4
      %s19 = int_to_ptr.vmem [resolvable:$true] %s18
      %24 = dma.hbm_to_vmem [thread:$0]  %s1, 2048, %s19, [#allocation3], 128, 128, 8
    $region9: #{tpu_custom_call.1} parent=1 // pred_fallthru
      _
    // Predicated region
    $region10: #{tpu_custom_call.1} parent=1 // pred_check
      _
    $region11: #{tpu_custom_call.1} parent=1 // pred_check_branch
      %26 = sbr.rel (0) target = $region13
    $region12: #{tpu_custom_call.1} parent=1 // pred_region
      _
    $region13: #{tpu_custom_call.1} parent=1 // pred_fallthru
      _
    // Predicated region
    $region14: #{tpu_custom_call.1} parent=1 // pred_check
      _
    $region15: #{tpu_custom_call.1} parent=1 // pred_check_branch
      %28 = sbr.rel (0) target = $region17
    $region16: #{tpu_custom_call.1} parent=1 // pred_region
      _
    $region17: #{tpu_custom_call.1} parent=1 // pred_fallthru
      _
    // Predicated region
    $region18: #{tpu_custom_call.1} parent=1 // pred_check
      _
    $region19: #{tpu_custom_call.1} parent=1 // pred_check_branch
      %30 = sbr.rel (0) target = $region21
    $region20: #{tpu_custom_call.1} parent=1 // pred_region
      %31 = dma.done [#allocation3], 2048
    $region21: #{tpu_custom_call.1} parent=1 // pred_fallthru
      _
    %v33 = vld [vmem:[%s0] sm:$0xf]
    %v34 = vld [vmem:[#allocation2] sm:$0xff]
    %v35 = vld [vmem:[#allocation2 + $0x8] sm:$0xff]
    %v36 = vld [vmem:[#allocation2 + $0x10] sm:$0xff]
    %v37 = vld [vmem:[#allocation2 + $0x18] sm:$0xff]
    %v38 = vld [vmem:[#allocation2 + $0x20] sm:$0xff]
    %v39 = vld [vmem:[#allocation2 + $0x28] sm:$0xff]
    %v40 = vld [vmem:[#allocation2 + $0x30] sm:$0xff]
    %v41 = vld [vmem:[#allocation2 + $0x38] sm:$0xff]
    %v42 = vld [vmem:[#allocation2 + $0x40] sm:$0xff]
    %v43 = vld [vmem:[#allocation2 + $0x48] sm:$0xff]
    %v44 = vld [vmem:[#allocation2 + $0x50] sm:$0xff]
    %v45 = vld [vmem:[#allocation2 + $0x58] sm:$0xff]
    %v46 = vld [vmem:[#allocation2 + $0x60] sm:$0xff]
    %v47 = vld [vmem:[#allocation2 + $0x68] sm:$0xff]
    %v48 = vld [vmem:[#allocation2 + $0x70] sm:$0xff]
    %v49 = vld [vmem:[#allocation2 + $0x78] sm:$0xff]
    %v66 = vunpack.c.l.b16 %v34
    %v67 = vunpack.c.h.b16 %v34
    %v68 = vunpack.c.l.b16 %v35
    %v69 = vunpack.c.h.b16 %v35
    %v70 = vunpack.c.l.b16 %v36
    %v71 = vunpack.c.h.b16 %v36
    %v72 = vunpack.c.l.b16 %v37
    %v73 = vunpack.c.h.b16 %v37
    %v74 = vunpack.c.l.b16 %v38
    %v75 = vunpack.c.h.b16 %v38
    %v76 = vunpack.c.l.b16 %v39
    %v77 = vunpack.c.h.b16 %v39
    %v78 = vunpack.c.l.b16 %v40
    %v79 = vunpack.c.h.b16 %v40
    %v80 = vunpack.c.l.b16 %v41
    %v81 = vunpack.c.h.b16 %v41
    %v82 = vunpack.c.l.b16 %v42
    %v83 = vunpack.c.h.b16 %v42
    %v84 = vunpack.c.l.b16 %v43
    %v85 = vunpack.c.h.b16 %v43
    %v86 = vunpack.c.l.b16 %v44
    %v87 = vunpack.c.h.b16 %v44
    %v88 = vunpack.c.l.b16 %v45
    %v89 = vunpack.c.h.b16 %v45
    %v90 = vunpack.c.l.b16 %v46
    %v91 = vunpack.c.h.b16 %v46
    %v92 = vunpack.c.l.b16 %v47
    %v93 = vunpack.c.h.b16 %v47
    %v94 = vunpack.c.l.b16 %v48
    %v95 = vunpack.c.h.b16 %v48
    %v96 = vunpack.c.l.b16 %v49
    %v97 = vunpack.c.h.b16 %v49
    %v98 = vpack.c.b16 %v68, %v66
    %v99 = vpack.c.b16 %v69, %v67
    %v100 = vpack.c.b16 %v72, %v70
    %v101 = vpack.c.b16 %v73, %v71
    %v102 = vpack.c.b16 %v76, %v74
    %v103 = vpack.c.b16 %v77, %v75
    %v104 = vpack.c.b16 %v80, %v78
    %v105 = vpack.c.b16 %v81, %v79
    %v106 = vpack.c.b16 %v84, %v82
    %v107 = vpack.c.b16 %v85, %v83
    %v108 = vpack.c.b16 %v88, %v86
    %v109 = vpack.c.b16 %v89, %v87
    %v110 = vpack.c.b16 %v92, %v90
    %v111 = vpack.c.b16 %v93, %v91
    %v112 = vpack.c.b16 %v96, %v94
    %v113 = vpack.c.b16 %v97, %v95
    %130 = vmatprep.subr.bf16.mxu0 %v113
    %131 = vmatpush1.bf16.msra.mxu0 %v112
    %132 = vmatprep.subr.bf16.mxu0 %v111
    %133 = vmatpush1.bf16.msra.mxu0 %v110
    %134 = vmatprep.subr.bf16.mxu0 %v109
    %135 = vmatpush1.bf16.msra.mxu0 %v108
    %136 = vmatprep.subr.bf16.mxu0 %v107
    %137 = vmatpush1.bf16.msra.mxu0 %v106
    %138 = vmatprep.subr.bf16.mxu0 %v105
    %139 = vmatpush1.bf16.msra.mxu0 %v104
    %140 = vmatprep.subr.bf16.mxu0 %v103
    %141 = vmatpush1.bf16.msra.mxu0 %v102
    %142 = vmatprep.subr.bf16.mxu0 %v101
    %143 = vmatpush1.bf16.msra.mxu0 %v100
    %144 = vmatprep.subr.bf16.mxu0 %v99
    %145 = vmatpush1.bf16.msra.mxu0 %v98
    %146 = vmatprep.subr.bf16.mxu0 0
    %147 = vmatpush2.bf16.msra.mxu0 0
    %148 = vmatprep.subr.bf16.mxu0 0
    %149 = vmatpush2.bf16.msra.mxu0 0
    %150 = vmatprep.subr.bf16.mxu0 0
    %151 = vmatpush2.bf16.msra.mxu0 0
    %152 = vmatprep.subr.bf16.mxu0 0
    %153 = vmatpush2.bf16.msra.mxu0 0
    %154 = vmatprep.subr.bf16.mxu0 0
    %155 = vmatpush2.bf16.msra.mxu0 0
    %156 = vmatprep.subr.bf16.mxu0 0
    %157 = vmatpush2.bf16.msra.mxu0 0
    %158 = vmatprep.subr.bf16.mxu0 0
    %159 = vmatpush2.bf16.msra.mxu0 0
    %160 = vmatprep.subr.bf16.mxu0 0
    %161 = vmatpush2.bf16.msra.mxu0 0
    %162 = vmatprep.mubr.bf16.mxu0 0
    %163 = vmatmul.mubr.bf16.gmra.mxu0 %v33
    %v164 = vpop.f32.mrf.mxu0
    %v165 = vadd.f32 0.0, %v164
    %v166 = vpop.f32.mrf.mxu0
    %v167 = vadd.f32 0.0, %v166
    %v168 = vpop.f32.mrf.mxu0
    %v169 = vpop.f32.mrf.mxu0
    %170 = vdwg.mxu0
    %v171 = vmul.f32 %v165, %v165
    %v172 = vmul.f32 %v167, %v167
    %v173 = vsub.f32 1.0, %v171
    %v174 = vsub.f32 1.0, %v172
    %v175 = vmax.f32 %v173, 0.0
    %v176 = vmax.f32 %v174, 0.0
    %v177 = vrsqrt.pop %v175
    %v178 = vmul.f32 %v175, %v177
    %vm179 = vcmp.eq.f32.partialorder %v175, inf
    %v180 = vsel %vm179, %v175, %v178
    %vm181 = vcmp.eq.f32.partialorder %v175, 0.0
    %v182 = vand.u32 %v175, 2147483648
    %v183 = vsel %vm181, %v182, %v180
    %v184 = vrsqrt.pop %v176
    %v185 = vmul.f32 %v176, %v184
    %vm186 = vcmp.eq.f32.partialorder %v176, inf
    %v187 = vsel %vm186, %v176, %v185
    %vm188 = vcmp.eq.f32.partialorder %v176, 0.0
    %v189 = vand.u32 %v176, 2147483648
    %v190 = vsel %vm188, %v189, %v187
    %v191 = vmul.f32 %v165, 0.87758255
    %v192 = vmul.f32 %v167, 0.87758255
    %v193 = vmul.f32 %v183, 0.47942555
    %v194 = vmul.f32 %v190, 0.47942555
    %v195 = vsub.f32 %v191, %v193
    %v196 = vsub.f32 %v192, %v194
    %v197 = vsub.f32 %v165, -0.87758255
    %v198 = vsub.f32 %v167, -0.87758255
    %vm199 = vcmp.gt.f32.partialorder %v197, 0.0
    %vm200 = vcmp.gt.f32.partialorder %v198, 0.0
    %v201 = vsub.f32 %v165, 0.23971277
    %v202 = vsub.f32 %v167, 0.23971277
    %v203 = vsel %vm199, %v195, %v201
    %v204 = vsel %vm200, %v196, %v202
    %v205 = vld [vmem:[%s3] sm:$0x3]
    %v206 = vld [vmem:[%s2] sm:$0xff]
    %v207 = vlaneseq
    %v208 = vshrl.u32 %v207, 7
    %v209 = vsub.s32 0, %v208
    %v210 = vrot.slane %v205, %v209
    %v211 = vlaneseq
    %v212 = vshrl.u32 %v211, 7
    %v213 = vsub.s32 1, %v212
    %v214 = vrot.slane %v205, %v213
    %215 = vset.pattern.permute.xlu0 0
    %216 = vperm.xlu0 %215, %v206
    %v217 = vpop.permute.xlu0 %216
    %vm218 = vcmp.eq.s32.totalorder %v210, %v217
    %vm219 = vcmp.eq.s32.totalorder %v214, %v217
    %v220 = vsel %vm218, %v203, %v165
    %v221 = vsel %vm219, %v204, %v167
    %v222 = vmul.f32 %v220, 32.0
    %v223 = vmul.f32 %v221, 32.0
    %224 = vst [vmem:[#allocation5] sm:$0xff] %v222
    %225 = vst [vmem:[#allocation5 + $0x8] sm:$0xff] %v223
    // Predicated region
    $region22: #{tpu_custom_call.1} parent=1 // pred_check
      _
    $region23: #{tpu_custom_call.1} parent=1 // pred_check_branch
      %227 = sbr.rel (0) target = $region25
    $region24: #{tpu_custom_call.1} parent=1 // pred_region
      %s229 = ssub.s32 256, 256
      %230 = vsyncadd [#allocation4], %s229
      %s232 = sshll.u32 [#allocation5], 4
      %s233 = int_to_ptr.vmem [resolvable:$true] %s232
      %235 = dma.vmem_to_hbm [thread:$0]  %s233, 256, %s4, [#allocation4]
    $region25: #{tpu_custom_call.1} parent=1 // pred_fallthru
      _
    // Predicated region
    $region26: #{tpu_custom_call.1} parent=1 // pred_check
      _
    $region27: #{tpu_custom_call.1} parent=1 // pred_check_branch
      %237 = sbr.rel (0) target = $region29
    $region28: #{tpu_custom_call.1} parent=1 // pred_region
      %238 = dma.done [#allocation4], 256
    $region29: #{tpu_custom_call.1} parent=1 // pred_fallthru
      _
    %239 = vsyncpa [#allocation3], 1
    %240 = vsyncpa [#allocation4], 1

</llo_original>
